<compile_context>
chip_gen: v5e
topology: v5e:2x2
jax: 0.10.0
libtpu: 0.0.40
codegen_flags: <defaults>
</compile_context>

<pallas_src>
import jax
import jax.numpy as jnp
from jax.experimental import pallas as pl
from jax.experimental.pallas import tpu as pltpu


def _round_up(a, m):
    return -(-a // m) * m


def _maml_policy_kernel(x_ref, w1_ref, b1_ref, w2_ref, b2_ref, o_ref):
    # In-kernel f32 -> bf16 cast of the streamed x tile (VPU op, HBM-bound kernel).
    x = x_ref[...].astype(jnp.bfloat16)
    # fc1: bf16 operands on the MXU, f32 accumulation; bias/relu in f32.
    h = jnp.dot(x, w1_ref[...], preferred_element_type=jnp.float32)
    h = jnp.maximum(h + b1_ref[...], 0.0)                  # (tm, 128) + (1, 128)
    # fc2: cast activations back to bf16 for the MXU, accumulate in f32.
    y = jnp.dot(h.astype(jnp.bfloat16), w2_ref[...],
                preferred_element_type=jnp.float32)
    y = y + b2_ref[...]                                    # (tm, 128) + (1, 128)
    # Lane-dense 128-wide bf16 store (halves the dominant writeback stream).
    o_ref[...] = jax.nn.sigmoid(y).astype(o_ref.dtype)


def prepare_params(w1, b1, w2, b2):
    """One-time padding + bf16 cast of the weights (do NOT call per forward).

    w1: (input_dim, 64), b1: (64,) or (1, 64), w2: (64, output_dim),
    b2: (output_dim,) or (1, output_dim).
    """
    in_dim, hidden = w1.shape
    out_dim = w2.shape[1]
    H = _round_up(max(hidden, 128), 128)
    OUT = _round_up(max(out_dim, 128), 128)

    w1_p = jnp.zeros((in_dim, H), jnp.bfloat16).at[:, :hidden].set(
        w1.astype(jnp.bfloat16))
    b1_p = jnp.zeros((1, H), jnp.float32).at[:, :hidden].set(
        b1.astype(jnp.float32).reshape(1, hidden))
    w2_p = jnp.zeros((H, OUT), jnp.bfloat16).at[:hidden, :out_dim].set(
        w2.astype(jnp.bfloat16))
    b2_p = jnp.zeros((1, OUT), jnp.float32).at[:, :out_dim].set(
        b2.astype(jnp.float32).reshape(1, out_dim))
    return (w1_p, b1_p, w2_p, b2_p, out_dim)


def maml_policy_forward(x, prepared_params, *, m_tile=512):
    """x: (B, input_dim) f32. prepared_params: output of prepare_params().
    Returns (B, output_dim) f32."""
    w1_p, b1_p, w2_p, b2_p, out_dim = prepared_params
    B, in_dim = x.shape
    H = w1_p.shape[1]
    OUT = w2_p.shape[1]

    # Batch tile selection:
    #  * small B: round up to the 8-sublane granule, single grid step.
    #  * B >= 512 rows: cap the tile so there are >= 2 blocks (both v7x TCs get
    #    work) while keeping tm a multiple of 256 (v6e/v7x MXU M) and 128 (v5e).
    B_up = _round_up(B, 8)
    if B_up >= 512:
        tm = min(m_tile, _round_up(B_up // 2, 256))
    elif B_up >= 256:
        tm = 256
    else:
        tm = B_up
    grid_m = pl.cdiv(B, tm)

    out = pl.pallas_call(
        _maml_policy_kernel,
        out_shape=jax.ShapeDtypeStruct((B, OUT), jnp.bfloat16),
        grid_spec=pltpu.PrefetchScalarGridSpec(
            num_scalar_prefetch=0,
            grid=(grid_m,),
            in_specs=[
                pl.BlockSpec((tm, in_dim), lambda i: (i, 0)),   # x tile streams (f32)
                pl.BlockSpec((in_dim, H), lambda i: (0, 0)),    # weights VMEM-resident
                pl.BlockSpec((1, H), lambda i: (0, 0)),
                pl.BlockSpec((H, OUT), lambda i: (0, 0)),
                pl.BlockSpec((1, OUT), lambda i: (0, 0)),
            ],
            out_specs=pl.BlockSpec((tm, OUT), lambda i: (i, 0)),
        ),
        compiler_params=pltpu.CompilerParams(
            dimension_semantics=("parallel",)),   # both TCs on v7x; no-op on v5e/v6e
    )(x, w1_p, b1_p, w2_p, b2_p)

    # Tiny (B, out_dim) slice; cast the bf16 store back to f32 for callers.
    return out[:, :out_dim].astype(jnp.float32)


def init_params(key, input_dim, output_dim, hidden=64):
    """Deterministic init mimicking nn.Linear's U(-1/sqrt(fan_in), 1/sqrt(fan_in))."""
    k1, k2, k3, k4 = jax.random.split(key, 4)
    bound1 = 1.0 / jnp.sqrt(input_dim)
    bound2 = 1.0 / jnp.sqrt(hidden)
    w1 = jax.random.uniform(k1, (input_dim, hidden), jnp.float32, -bound1, bound1)
    b1 = jax.random.uniform(k2, (1, hidden), jnp.float32, -bound1, bound1)
    w2 = jax.random.uniform(k3, (hidden, output_dim), jnp.float32, -bound2, bound2)
    b2 = jax.random.uniform(k4, (1, output_dim), jnp.float32, -bound2, bound2)
    return w1, b1, w2, b2


def reference_forward(x, w1, b1, w2, b2):
    h = jnp.maximum(x @ w1 + b1, 0.0)
    return jax.nn.sigmoid(h @ w2 + b2)


if __name__ == "__main__":
    key = jax.random.PRNGKey(0)
    kx, kp = jax.random.split(key)

    batch, input_dim, output_dim = 8, 16, 4
    x = jax.random.normal(kx, (batch, input_dim), jnp.float32)
    w1, b1, w2, b2 = init_params(kp, input_dim, output_dim)

    # One-time weight preparation (padding + bf16 cast), reused across calls.
    params = prepare_params(w1, b1, w2, b2)

    out = maml_policy_forward(x, params)
    out = jax.block_until_ready(out)

    ref = reference_forward(x, w1, b1, w2, b2)
    assert out.shape == (batch, output_dim)
    # bf16 matmul operands + bf16 output store -> small roundoff vs f32 reference.
    assert jnp.allclose(out, ref, atol=2e-2, rtol=0), jnp.max(jnp.abs(out - ref))

    # TODO(synk): the `adapt` inner-loop gradient step is training-time autograd
    # logic, not part of the forward pass; it has no kernel equivalent here.
    print("KERNEL_OK")
</pallas_src>

<mosaic_0001>
module attributes {stable_mosaic.version = 11 : i64} {
  func.func @_maml_policy_kernel(%arg0: i32, %arg1: memref<8x16xf32, #tpu.memory_space<vmem>>, %arg2: memref<16x128xbf16, #tpu.memory_space<vmem>>, %arg3: memref<1x128xf32, #tpu.memory_space<vmem>>, %arg4: memref<128x128xbf16, #tpu.memory_space<vmem>>, %arg5: memref<1x128xf32, #tpu.memory_space<vmem>>, %arg6: memref<8x128xbf16, #tpu.memory_space<vmem>>) attributes {dimension_semantics = [#tpu.dimension_semantics<parallel>], iteration_bounds = array<i64: 1>, scalar_prefetch = 0 : i64, scratch_operands = 0 : i64, tpu.core_type = #tpu.core_type<tc>, window_params = [{transform_indices = @transform_0, window_bounds = array<i64: 8, 16>}, {pipeline_mode = #tpu.pipeline_mode<synchronous>, transform_indices = @transform_1, window_bounds = array<i64: 16, 128>}, {pipeline_mode = #tpu.pipeline_mode<synchronous>, transform_indices = @transform_2, window_bounds = array<i64: 1, 128>}, {pipeline_mode = #tpu.pipeline_mode<synchronous>, transform_indices = @transform_3, window_bounds = array<i64: 128, 128>}, {pipeline_mode = #tpu.pipeline_mode<synchronous>, transform_indices = @transform_4, window_bounds = array<i64: 1, 128>}, {transform_indices = @transform_5, window_bounds = array<i64: 8, 128>}]} {
    %c0 = arith.constant 0 : index
    %c0_0 = arith.constant 0 : index
    %0 = vector.load %arg1[%c0, %c0_0] : memref<8x16xf32, #tpu.memory_space<vmem>>, vector<8x16xf32>
    %1 = arith.truncf %0 : vector<8x16xf32> to vector<8x16xbf16>
    %c0_1 = arith.constant 0 : index
    %c0_2 = arith.constant 0 : index
    %2 = vector.load %arg2[%c0_1, %c0_2] : memref<16x128xbf16, #tpu.memory_space<vmem>>, vector<16x128xbf16>
    %cst = arith.constant dense<0.000000e+00> : vector<8x128xf32>
    %3 = tpu.matmul %1, %2, %cst {dimension_numbers = #tpu.dot_dimension_numbers<[1], [0], [0], [1], [0, 0, 1, 1], [], []>} : vector<8x16xbf16>, vector<16x128xbf16>, vector<8x128xf32> -> vector<8x128xf32>
    %c0_3 = arith.constant 0 : index
    %c0_4 = arith.constant 0 : index
    %4 = vector.load %arg3[%c0_3, %c0_4] : memref<1x128xf32, #tpu.memory_space<vmem>>, vector<1x128xf32>
    %5 = vector.broadcast %4 : vector<1x128xf32> to vector<8x128xf32>
    %6 = arith.addf %3, %5 : vector<8x128xf32>
    %cst_5 = arith.constant 0.000000e+00 : f32
    %7 = vector.broadcast %cst_5 : f32 to vector<8x128xf32>
    %8 = arith.maximumf %6, %7 : vector<8x128xf32>
    %9 = arith.truncf %8 : vector<8x128xf32> to vector<8x128xbf16>
    %c0_6 = arith.constant 0 : index
    %c0_7 = arith.constant 0 : index
    %10 = vector.load %arg4[%c0_6, %c0_7] : memref<128x128xbf16, #tpu.memory_space<vmem>>, vector<128x128xbf16>
    %cst_8 = arith.constant dense<0.000000e+00> : vector<8x128xf32>
    %11 = tpu.matmul %9, %10, %cst_8 {dimension_numbers = #tpu.dot_dimension_numbers<[1], [0], [0], [1], [0, 0, 1, 1], [], []>} : vector<8x128xbf16>, vector<128x128xbf16>, vector<8x128xf32> -> vector<8x128xf32>
    %c0_9 = arith.constant 0 : index
    %c0_10 = arith.constant 0 : index
    %12 = vector.load %arg5[%c0_9, %c0_10] : memref<1x128xf32, #tpu.memory_space<vmem>>, vector<1x128xf32>
    %13 = vector.broadcast %12 : vector<1x128xf32> to vector<8x128xf32>
    %14 = arith.addf %11, %13 : vector<8x128xf32>
    %15 = arith.negf %14 : vector<8x128xf32>
    %16 = math.exp %15 : vector<8x128xf32>
    %cst_11 = arith.constant 1.000000e+00 : f32
    %17 = vector.broadcast %cst_11 : f32 to vector<8x128xf32>
    %18 = arith.addf %17, %16 : vector<8x128xf32>
    %19 = arith.divf %17, %18 : vector<8x128xf32>
    %20 = arith.truncf %19 : vector<8x128xf32> to vector<8x128xbf16>
    %c0_12 = arith.constant 0 : index
    %c0_13 = arith.constant 0 : index
    %21 = vector.load %arg6[%c0_12, %c0_13] : memref<8x128xbf16, #tpu.memory_space<vmem>>, vector<8x128xbf16>
    tpu.vector_store %arg6[%c0_12, %c0_13], %20 {strides = array<i32>} : memref<8x128xbf16, #tpu.memory_space<vmem>>, vector<8x128xbf16>,
    return
  }
  func.func @transform_0(%arg0: i32) -> (i32, i32) {
    %c0_i32 = arith.constant 0 : i32
    %c0_i32_0 = arith.constant 0 : i32
    return %arg0, %c0_i32 : i32, i32
  }
  func.func @transform_1(%arg0: i32) -> (i32, i32) {
    %c0_i32 = arith.constant 0 : i32
    %c0_i32_0 = arith.constant 0 : i32
    %c0_i32_1 = arith.constant 0 : i32
    return %c0_i32, %c0_i32_0 : i32, i32
  }
  func.func @transform_2(%arg0: i32) -> (i32, i32) {
    %c0_i32 = arith.constant 0 : i32
    %c0_i32_0 = arith.constant 0 : i32
    %c0_i32_1 = arith.constant 0 : i32
    return %c0_i32, %c0_i32_0 : i32, i32
  }
  func.func @transform_3(%arg0: i32) -> (i32, i32) {
    %c0_i32 = arith.constant 0 : i32
    %c0_i32_0 = arith.constant 0 : i32
    %c0_i32_1 = arith.constant 0 : i32
    return %c0_i32, %c0_i32_0 : i32, i32
  }
  func.func @transform_4(%arg0: i32) -> (i32, i32) {
    %c0_i32 = arith.constant 0 : i32
    %c0_i32_0 = arith.constant 0 : i32
    %c0_i32_1 = arith.constant 0 : i32
    return %c0_i32, %c0_i32_0 : i32, i32
  }
  func.func @transform_5(%arg0: i32) -> (i32, i32) {
    %c0_i32 = arith.constant 0 : i32
    %c0_i32_0 = arith.constant 0 : i32
    return %arg0, %c0_i32 : i32, i32
  }
}

</mosaic_0001>

<llo_original>
// kernel: tpu_custom_call.1
$region0: #{tpu_custom_call.1}
  #allocation0 [shape = 'u32[]', space=smem, size = 0x4, offset = 0x4, fixed_abs, tag = 'smem constant byte address 0x4 - core index']
  #allocation1 [shape = 'u32[72,128]{1,0:T(1,128)}', space=vmem, size = 0x9000, scoped, tag = 'internal scratch']
  %s0 = inlined_call_operand.hbm [shape: f32[8,16], index: 0, kind: input, shape index: {}]
  %s1 = inlined_call_operand.hbm [shape: bf16[16,128], index: 1, kind: input, shape index: {}]
  %s2 = inlined_call_operand.vmem [shape: f32[1,128], index: 2, kind: input, shape index: {}]
  %s3 = inlined_call_operand.hbm [shape: bf16[128,128], index: 3, kind: input, shape index: {}]
  %s4 = inlined_call_operand.vmem [shape: f32[1,128], index: 4, kind: input, shape index: {}]
  %s5 = inlined_call_operand.hbm [shape: bf16[8,128], index: 5, kind: output, shape index: {}]
  %s6 = sld [smem:[#allocation0]]
  $region42: #{tpu_custom_call.1} parent=0
    _
  %s8 = ssub.s32 1, %s6
  %s9 = scalar_select 0, %s8, %s6
  $region1: #{tpu_custom_call.1} parent=0
    #allocation2 [shape = 'u8[4096]{0}', space=vmem, size = 0x1000, scoped, tag = 'input window, operand 0, single buffered']
    #allocation3 [shape = 's32[1]{0}', space=sflag, size = 0x4, scoped, tag = 'scoped memory for tpu_custom_call.1']
    #allocation4 [shape = 's32[1]{0}', space=sflag, size = 0x4, scoped, tag = 'scoped memory for tpu_custom_call.1']
    #allocation5 [shape = 'u8[4096]{0}', space=vmem, size = 0x1000, scoped, tag = 'input window, operand 1, single buffered']
    #allocation6 [shape = 's32[1]{0}', space=sflag, size = 0x4, scoped, tag = 'scoped memory for tpu_custom_call.1']
    #allocation7 [shape = 'u8[32768]{0}', space=vmem, size = 0x8000, scoped, tag = 'input window, operand 3, single buffered']
    #allocation8 [shape = 'u8[2048]{0}', space=vmem, size = 0x800, scoped, tag = 'output window, operand 0, single buffered']
    %10 = vsyncpa [#allocation3], 0
    %11 = vsyncpa [#allocation6], 0
    %12 = vsyncpa [#allocation4], 0
    // Predicated region
    $region2: #{tpu_custom_call.1} parent=1 // pred_check
      _
    $region3: #{tpu_custom_call.1} parent=1 // pred_check_branch
      %14 = sbr.rel (0) target = $region5
    $region4: #{tpu_custom_call.1} parent=1 // pred_region
      %16 = vsyncadd [#allocation3], 0
      %s18 = sshll.u32 %s0, 4
      %s19 = int_to_ptr.hbm [resolvable:$true] %s18
      %s20 = sshll.u32 [#allocation2], 4
      %s21 = int_to_ptr.vmem [resolvable:$true] %s20
      %23 = dma.hbm_to_vmem [thread:$0]  %s19, 128, %s21, [#allocation3]
    $region5: #{tpu_custom_call.1} parent=1 // pred_fallthru
      _
    // Predicated region
    $region6: #{tpu_custom_call.1} parent=1 // pred_check
      _
    $region7: #{tpu_custom_call.1} parent=1 // pred_check_branch
      %25 = sbr.rel (0) target = $region9
    $region8: #{tpu_custom_call.1} parent=1 // pred_region
      %27 = vsyncadd [#allocation6], 0
      %s28 = sshll.u32 %s1, 4
      %s29 = int_to_ptr.hbm [resolvable:$true] %s28
      %s30 = sshll.u32 [#allocation5], 4
      %s31 = int_to_ptr.vmem [resolvable:$true] %s30
      %36 = dma.hbm_to_vmem [thread:$0]  %s29, 128, %s31, [#allocation6], 64, 64, 4
    $region9: #{tpu_custom_call.1} parent=1 // pred_fallthru
      _
    // Predicated region
    $region10: #{tpu_custom_call.1} parent=1 // pred_check
      _
    $region11: #{tpu_custom_call.1} parent=1 // pred_check_branch
      %38 = sbr.rel (0) target = $region13
    $region12: #{tpu_custom_call.1} parent=1 // pred_region
      _
    $region13: #{tpu_custom_call.1} parent=1 // pred_fallthru
      _
    // Predicated region
    $region14: #{tpu_custom_call.1} parent=1 // pred_check
      _
    $region15: #{tpu_custom_call.1} parent=1 // pred_check_branch
      %40 = sbr.rel (0) target = $region17
    $region16: #{tpu_custom_call.1} parent=1 // pred_region
      %42 = vsyncadd [#allocation6], 0
      %s43 = sshll.u32 %s3, 4
      %s44 = int_to_ptr.hbm [resolvable:$true] %s43
      %s45 = sshll.u32 [#allocation7], 4
      %s46 = int_to_ptr.vmem [resolvable:$true] %s45
      %51 = dma.hbm_to_vmem [thread:$0]  %s44, 1024, %s46, [#allocation6], 64, 64, 4
    $region17: #{tpu_custom_call.1} parent=1 // pred_fallthru
      _
    // Predicated region
    $region18: #{tpu_custom_call.1} parent=1 // pred_check
      _
    $region19: #{tpu_custom_call.1} parent=1 // pred_check_branch
      %53 = sbr.rel (0) target = $region21
    $region20: #{tpu_custom_call.1} parent=1 // pred_region
      _
    $region21: #{tpu_custom_call.1} parent=1 // pred_fallthru
      _
    // Predicated region
    $region22: #{tpu_custom_call.1} parent=1 // pred_check
      _
    $region23: #{tpu_custom_call.1} parent=1 // pred_check_branch
      %55 = sbr.rel (0) target = $region25
    $region24: #{tpu_custom_call.1} parent=1 // pred_region
      %57 = dma.done [#allocation3], 128
    $region25: #{tpu_custom_call.1} parent=1 // pred_fallthru
      _
    // Predicated region
    $region26: #{tpu_custom_call.1} parent=1 // pred_check
      _
    $region27: #{tpu_custom_call.1} parent=1 // pred_check_branch
      %59 = sbr.rel (0) target = $region29
    $region28: #{tpu_custom_call.1} parent=1 // pred_region
      %61 = dma.done [#allocation6], 128
    $region29: #{tpu_custom_call.1} parent=1 // pred_fallthru
      _
    // Predicated region
    $region30: #{tpu_custom_call.1} parent=1 // pred_check
      _
    $region31: #{tpu_custom_call.1} parent=1 // pred_check_branch
      %63 = sbr.rel (0) target = $region33
    $region32: #{tpu_custom_call.1} parent=1 // pred_region
      %65 = dma.done [#allocation6], 1024
    $region33: #{tpu_custom_call.1} parent=1 // pred_fallthru
      _
    %v67 = vld [vmem:[#allocation2] sm:$0xff]
    %v68 = vpack.c.bf16 %v67, %v67
    %v69 = vld [vmem:[#allocation5] sm:$0xf]
    %v70 = vld [vmem:[#allocation5 + $0x4] sm:$0xf]
    %v71 = vld [vmem:[%s2] sm:$0x1]
    %v73 = vperm.slane %v71, 0
    %v77 = vunpack.c.l.b16 %v69
    %v78 = vunpack.c.l.b16 %v70
    %v79 = vpack.c.b16 %v78, %v77
    %vm81 = vcmask 130048
    %v83 = vsel %vm81, %v68, 0
    %85 = vmatpush.bf16.msra.mxu0 0
    %86 = vmatpush.bf16.msra.mxu0 0
    %87 = vmatpush.bf16.msra.mxu0 0
    %88 = vmatpush.bf16.msra.mxu0 0
    %89 = vmatpush.bf16.msra.mxu0 0
    %90 = vmatpush.bf16.msra.mxu0 0
    %91 = vmatpush.bf16.msra.mxu0 0
    %92 = vmatpush.bf16.msra.mxu0 %v79
    %93 = vmatmul.bf16.gmra.mxu0 %v83
    %v94 = vpop.f32.mrf.mxu0
    %v95 = vadd.f32 %v73, %v94
    %v96 = vpop.f32.mrf.mxu0
    %97 = vdwg.mxu0
    %v98 = vmax.f32 %v95, 0.0
    %v99 = vpack.c.bf16 %v98, %v98
    %v100 = vld [vmem:[#allocation7] sm:$0xf]
    %v101 = vld [vmem:[#allocation7 + $0x4] sm:$0xf]
    %v102 = vld [vmem:[#allocation7 + $0x8] sm:$0xf]
    %v103 = vld [vmem:[#allocation7 + $0xc] sm:$0xf]
    %v104 = vld [vmem:[#allocation7 + $0x10] sm:$0xf]
    %v105 = vld [vmem:[#allocation7 + $0x14] sm:$0xf]
    %v106 = vld [vmem:[#allocation7 + $0x18] sm:$0xf]
    %v107 = vld [vmem:[#allocation7 + $0x1c] sm:$0xf]
    %v108 = vld [vmem:[#allocation7 + $0x20] sm:$0xf]
    %v109 = vld [vmem:[#allocation7 + $0x24] sm:$0xf]
    %v110 = vld [vmem:[#allocation7 + $0x28] sm:$0xf]
    %v111 = vld [vmem:[#allocation7 + $0x2c] sm:$0xf]
    %v112 = vld [vmem:[#allocation7 + $0x30] sm:$0xf]
    %v113 = vld [vmem:[#allocation7 + $0x34] sm:$0xf]
    %v114 = vld [vmem:[#allocation7 + $0x38] sm:$0xf]
    %v115 = vld [vmem:[#allocation7 + $0x3c] sm:$0xf]
    %v116 = vld [vmem:[%s4] sm:$0x1]
    %v118 = vperm.slane %v116, 0
    %v136 = vunpack.c.l.b16 %v100
    %v137 = vunpack.c.l.b16 %v101
    %v138 = vunpack.c.l.b16 %v102
    %v139 = vunpack.c.l.b16 %v103
    %v140 = vunpack.c.l.b16 %v104
    %v141 = vunpack.c.l.b16 %v105
    %v142 = vunpack.c.l.b16 %v106
    %v143 = vunpack.c.l.b16 %v107
    %v144 = vunpack.c.l.b16 %v108
    %v145 = vunpack.c.l.b16 %v109
    %v146 = vunpack.c.l.b16 %v110
    %v147 = vunpack.c.l.b16 %v111
    %v148 = vunpack.c.l.b16 %v112
    %v149 = vunpack.c.l.b16 %v113
    %v150 = vunpack.c.l.b16 %v114
    %v151 = vunpack.c.l.b16 %v115
    %v152 = vpack.c.b16 %v137, %v136
    %v153 = vpack.c.b16 %v139, %v138
    %v154 = vpack.c.b16 %v141, %v140
    %v155 = vpack.c.b16 %v143, %v142
    %v156 = vpack.c.b16 %v145, %v144
    %v157 = vpack.c.b16 %v147, %v146
    %v158 = vpack.c.b16 %v149, %v148
    %v159 = vpack.c.b16 %v151, %v150
    %168 = vmatpush.bf16.msra.mxu0 %v159
    %169 = vmatpush.bf16.msra.mxu0 %v158
    %170 = vmatpush.bf16.msra.mxu0 %v157
    %171 = vmatpush.bf16.msra.mxu0 %v156
    %172 = vmatpush.bf16.msra.mxu0 %v155
    %173 = vmatpush.bf16.msra.mxu0 %v154
    %174 = vmatpush.bf16.msra.mxu0 %v153
    %175 = vmatpush.bf16.msra.mxu0 %v152
    %176 = vmatmul.bf16.gmra.mxu0 %v99
    %v177 = vpop.f32.mrf.mxu0
    %v178 = vadd.f32 %v118, %v177
    %v179 = vpop.f32.mrf.mxu0
    %180 = vdwg.mxu0
    %v181 = vxor.u32 %v178, 2147483648
    %v182 = vmul.f32 %v181, 1.442695
    %v183 = vpow.pop %v182
    %v184 = vadd.f32 %v183, 1.0
    %v185 = vrcp.pop %v184
    %v186 = vmul.f32 %v184, %v185
    %v187 = vsub.f32 1.0, %v186
    %v188 = vmul.f32 %v185, %v187
    %v189 = vadd.f32 %v185, %v188
    %vm190 = vweird.f32 %v184
    %vm191 = vweird.f32 %v185
    %vm192 = vmor %vm190, %vm191
    %v193 = vsel %vm192, %v185, %v189
    %v194 = vand.u32 2147483647, %v184
    %vm195 = vcmp.eq.f32.partialorder %v194, 8.507059e+37
    %v196 = vand.u32 %v184, 2147483648
    %v197 = vor.u32 1.1754944e-38, %v196
    %v198 = vsel %vm195, %v197, %v193
    %v199 = vmul.f32 1.0, %v198
    %v200 = vpack.c.bf16 %v199, %v199
    %201 = vst [vmem:[#allocation8] sm:$0xf] %v200
    // Predicated region
    $region34: #{tpu_custom_call.1} parent=1 // pred_check
      _
    $region35: #{tpu_custom_call.1} parent=1 // pred_check_branch
      %203 = sbr.rel (0) target = $region37
    $region36: #{tpu_custom_call.1} parent=1 // pred_region
      %205 = vsyncadd [#allocation4], 0
      %s207 = sshll.u32 [#allocation8], 4
      %s208 = int_to_ptr.vmem [resolvable:$true] %s207
      %s209 = sshll.u32 %s5, 4
      %s210 = int_to_ptr.hbm [resolvable:$true] %s209
      %212 = dma.vmem_to_hbm [thread:$0]  %s208, 64, %s210, [#allocation4]
    $region37: #{tpu_custom_call.1} parent=1 // pred_fallthru
      _
    // Predicated region
    $region38: #{tpu_custom_call.1} parent=1 // pred_check
      _
    $region39: #{tpu_custom_call.1} parent=1 // pred_check_branch
      %214 = sbr.rel (0) target = $region41
    $region40: #{tpu_custom_call.1} parent=1 // pred_region
      %216 = dma.done [#allocation4], 64
    $region41: #{tpu_custom_call.1} parent=1 // pred_fallthru
      _
    %217 = vsyncpa [#allocation3], 1
    %218 = vsyncpa [#allocation6], 1
    %219 = vsyncpa [#allocation4], 1

</llo_original>
